<compile_context>
chip_gen: v6e
topology: v6e:2x2x1
jax: 0.10.0
libtpu: 0.0.40
codegen_flags: <defaults>
</compile_context>

<pallas_src>
import math
import functools

import jax
import jax.numpy as jnp
from jax.experimental import pallas as pl
from jax.experimental.pallas import tpu as pltpu


# ----------------------------- helpers ------------------------------------


def _round_up(x, m):
    return ((x + m - 1) // m) * m


def sinusoidal_pos_emb(t, dim):
    """Standard diffusion SinusoidalPosEmb: t (B,) -> (B, dim)."""
    half_dim = dim // 2
    scale = math.log(10000.0) / (half_dim - 1)
    freqs = jnp.exp(jnp.arange(half_dim, dtype=jnp.float32) * -scale)
    args = t.astype(jnp.float32)[:, None] * freqs[None, :]
    return jnp.concatenate([jnp.sin(args), jnp.cos(args)], axis=-1)


def _default_bf16_eup():
    """v6e / v7x (and later) have bf16 EUP/VPU paths; v2-v5 do not."""
    try:
        kind = jax.devices()[0].device_kind.lower()
    except Exception:
        return False
    return any(tag in kind for tag in ("v6", "v7", "7x", "v8"))


# ----------------------------- Pallas kernel -------------------------------


def _tanh_mlp_kernel(
    xs_ref, emb_ref,
    wt1_ref, bt1_ref,
    wxs_ref, wtf_ref, b1_ref,
    w2_ref, b2_ref, w3_ref, b3_ref,
    wf_ref, bf_ref,
    o_ref,
    *, max_action, bf16_eup,
):
    f32 = jnp.float32
    bf16 = jnp.bfloat16

    def mish(v):
        # mish(x) = x * n / (n + 2),  n = e^x (e^x + 2); clamp exp arg at 20
        # (mish(x) == x to f32 precision there).  exp runs in bf16 on chips
        # with a bf16 EUP; the approximate reciprocal stays in f32.
        if bf16_eup:
            v = v.astype(bf16)
        e = jnp.exp(jnp.minimum(v, 20.0))
        n = e * (e + 2.0)
        inv = pl.reciprocal((n + 2.0).astype(f32), approx=True)
        return (v * n * inv.astype(v.dtype)).astype(bf16)

    # ---- time_mlp first Linear + Mish (second Linear folded into layer 1)
    th = mish(
        jnp.dot(emb_ref[...], wt1_ref[...], preferred_element_type=f32)
        + bt1_ref[...]
    )

    # ---- cat([x, t, state]) @ W1 == [x,state]_pad @ W_xs + th @ (wt2@W_t) + b1'
    h = mish(
        jnp.dot(xs_ref[...], wxs_ref[...], preferred_element_type=f32)
        + jnp.dot(th, wtf_ref[...], preferred_element_type=f32)
        + b1_ref[...]
    )

    # ---- remaining mid_layer Linear + Mish blocks
    h = mish(jnp.dot(h, w2_ref[...], preferred_element_type=f32) + b2_ref[...])
    h = mish(jnp.dot(h, w3_ref[...], preferred_element_type=f32) + b3_ref[...])

    # ---- final_layer: Linear(256, out_pad) -> Tanh, then * max_action
    pre = jnp.dot(h, wf_ref[...], preferred_element_type=f32) + bf_ref[...]
    if bf16_eup:
        pre = pre.astype(bf16)
    o_ref[...] = (jnp.tanh(pre) * max_action).astype(o_ref.dtype)


# ----------------------------- param packing -------------------------------


def _prepare_kernel_params(params, action_dim, state_dim, t_dim, xs_pad, out_pad):
    """Fuse/pad/cast logical f32 params into kernel-ready bf16 weights."""
    bf16 = jnp.bfloat16
    f32 = jnp.float32

    w1 = params["w1"].astype(f32)              # (action+t+state, hidden)
    w1x = w1[:action_dim]
    w1t = w1[action_dim:action_dim + t_dim]
    w1s = w1[action_dim + t_dim:]
    wxs = jnp.concatenate([w1x, w1s], axis=0)  # rows match cat([x, state])
    pad_rows = xs_pad - wxs.shape[0]
    if pad_rows:
        wxs = jnp.pad(wxs, ((0, pad_rows), (0, 0)))   # zero rows vs zero-pad cols

    # Fold time_mlp's second Linear into the first hidden layer:
    #   (th @ wt2 + bt2) @ w1t == th @ (wt2 @ w1t) + bt2 @ w1t
    wtf = params["wt2"].astype(f32) @ w1t                        # (2*t_dim, hidden)
    b1f = params["b1"] + params["bt2"].astype(f32) @ w1t         # (1, hidden)

    wf, bf = params["wf"], params["bf"]
    pad_cols = out_pad - wf.shape[1]
    if pad_cols:
        wf = jnp.pad(wf, ((0, 0), (0, pad_cols)))     # lane-dense 128-wide output
        bf = jnp.pad(bf, ((0, 0), (0, pad_cols)))

    return dict(
        wt1=params["wt1"].astype(bf16), bt1=params["bt1"],
        wxs=wxs.astype(bf16), wtf=wtf.astype(bf16), b1=b1f,
        w2=params["w2"].astype(bf16), b2=params["b2"],
        w3=params["w3"].astype(bf16), b3=params["b3"],
        wf=wf.astype(bf16), bf=bf,
    )


# ----------------------------- wrapper -------------------------------------


def tanh_mlp_forward(x, time, state, params, max_action, t_dim=16, block_b=2048):
    """x: (B, action_dim), time: (B,), state: (B, state_dim) -> (B, action_dim)."""
    B, action_dim = x.shape
    state_dim = state.shape[1]
    hidden = params["w2"].shape[0]

    xs_dim = action_dim + state_dim
    xs_pad = _round_up(xs_dim, 32)                   # bf16-sublane-aligned K
    out_pad = _round_up(max(action_dim, 128), 128)   # lane-dense output slab

    kp = _prepare_kernel_params(params, action_dim, state_dim, t_dim, xs_pad, out_pad)

    # glue: sinusoidal embedding + [x, state] concat/pad, cast to bf16
    emb = sinusoidal_pos_emb(time, t_dim).astype(jnp.bfloat16)
    xs = jnp.concatenate([x, state], axis=1)
    if xs_pad != xs_dim:
        xs = jnp.pad(xs, ((0, 0), (0, xs_pad - xs_dim)))
    xs = xs.astype(jnp.bfloat16)

    # batch tile: large (amortize ~0.35us/step overhead) but split so any batch
    # big enough to divide yields >= 2 grid steps (feeds both v7x TensorCores).
    tb = min(block_b, max(16, _round_up(pl.cdiv(B, 2), 16)))
    if tb >= B:
        tb = B
    grid = (pl.cdiv(B, tb),)

    inputs = (
        xs, emb,
        kp["wt1"], kp["bt1"],
        kp["wxs"], kp["wtf"], kp["b1"],
        kp["w2"], kp["b2"], kp["w3"], kp["b3"],
        kp["wf"], kp["bf"],
    )

    # batch-tiled activations, resident (constant-index) weights/biases
    in_specs = [
        pl.BlockSpec((tb, xs_pad), lambda i: (i, 0)),
        pl.BlockSpec((tb, t_dim), lambda i: (i, 0)),
    ] + [pl.BlockSpec(a.shape, lambda i: (0, 0)) for a in inputs[2:]]
    out_specs = pl.BlockSpec((tb, out_pad), lambda i: (i, 0))

    flops = 2 * B * (
        t_dim * (2 * t_dim)
        + xs_pad * hidden + (2 * t_dim) * hidden
        + 2 * hidden * hidden + hidden * out_pad
    )
    transcendentals = B * (2 * (2 * t_dim + 3 * hidden) + out_pad)
    bytes_accessed = int(
        sum(a.size * a.dtype.itemsize for a in inputs) + B * out_pad * 2
    )

    kernel = functools.partial(
        _tanh_mlp_kernel,
        max_action=float(max_action),
        bf16_eup=_default_bf16_eup(),
    )

    out = pl.pallas_call(
        kernel,
        out_shape=jax.ShapeDtypeStruct((B, out_pad), jnp.bfloat16),
        grid=grid,
        in_specs=in_specs,
        out_specs=out_specs,
        compiler_params=pltpu.CompilerParams(
            dimension_semantics=("parallel",),
            # > v5e's 16 MiB scoped default, < v7x's 64 MiB physical VMEM.
            vmem_limit_bytes=48 * 1024 * 1024,
        ),
        cost_estimate=pl.CostEstimate(
            flops=flops,
            transcendentals=transcendentals,
            bytes_accessed=bytes_accessed,
        ),
    )(*inputs)

    return out[:, :action_dim].astype(jnp.float32)


# ----------------------------- param init ----------------------------------


def _linear_params(key, fan_in, fan_out):
    """PyTorch nn.Linear default init, weight stored transposed as (in, out)."""
    kw, kb = jax.random.split(key)
    bound = 1.0 / math.sqrt(fan_in)
    w = jax.random.uniform(kw, (fan_in, fan_out), jnp.float32, -bound, bound)
    b = jax.random.uniform(kb, (1, fan_out), jnp.float32, -bound, bound)
    return w, b


def init_params(key, state_dim, action_dim, t_dim=16, hidden=256):
    keys = jax.random.split(key, 6)
    input_dim = state_dim + action_dim + t_dim

    wt1, bt1 = _linear_params(keys[0], t_dim, t_dim * 2)
    wt2, bt2 = _linear_params(keys[1], t_dim * 2, t_dim)
    w1, b1 = _linear_params(keys[2], input_dim, hidden)
    w2, b2 = _linear_params(keys[3], hidden, hidden)
    w3, b3 = _linear_params(keys[4], hidden, hidden)
    wf, bf = _linear_params(keys[5], hidden, action_dim)

    return dict(
        wt1=wt1, bt1=bt1, wt2=wt2, bt2=bt2,
        w1=w1, b1=b1, w2=w2, b2=b2, w3=w3, b3=b3,
        wf=wf, bf=bf,
    )


# ----------------------------- reference (pure JAX) -------------------------


def tanh_mlp_reference(x, time, state, params, max_action, t_dim=16):
    """Original module structure; bf16 matmul inputs / f32 accumulation to
    match the kernel's precision policy, exact Mish (tanh(softplus))."""
    bf16, f32 = jnp.bfloat16, jnp.float32

    def dot(a, b):
        return jnp.dot(a.astype(bf16), b.astype(bf16), preferred_element_type=f32)

    def mish(v):
        return v * jnp.tanh(jax.nn.softplus(v))

    emb = sinusoidal_pos_emb(time, t_dim)
    th = mish(dot(emb, params["wt1"]) + params["bt1"])
    t = dot(th, params["wt2"]) + params["bt2"]
    cat = jnp.concatenate([x, t, state], axis=1)
    h = mish(dot(cat, params["w1"]) + params["b1"])
    h = mish(dot(h, params["w2"]) + params["b2"])
    h = mish(dot(h, params["w3"]) + params["b3"])
    return jnp.tanh(dot(h, params["wf"]) + params["bf"]) * max_action


# ----------------------------- main -----------------------------------------


if __name__ == "__main__":
    state_dim = 17
    action_dim = 6
    t_dim = 16
    max_action = 2.0

    root = jax.random.PRNGKey(0)
    k_params, kx, kt, ks = jax.random.split(root, 4)
    params = init_params(k_params, state_dim, action_dim, t_dim)

    def run_and_check(B):
        kxb, ktb, ksb = jax.random.split(jax.random.fold_in(root, B), 3)
        x = jax.random.normal(kxb, (B, action_dim), jnp.float32)
        time = jax.random.uniform(ktb, (B,), jnp.float32, 0.0, 1000.0)
        state = jax.random.normal(ksb, (B, state_dim), jnp.float32)

        out = tanh_mlp_forward(x, time, state, params, max_action, t_dim)
        out = jax.block_until_ready(out)
        ref = tanh_mlp_reference(x, time, state, params, max_action, t_dim)

        assert out.shape == (B, action_dim)
        # tolerance covers bf16 matmul inputs + approx-reciprocal Mish +
        # (on v6e/v7x) bf16 exp/tanh + bf16 output slab
        max_err = float(jnp.max(jnp.abs(out - ref)))
        assert jnp.allclose(out, ref, atol=3e-2, rtol=3e-2), (
            f"kernel/reference mismatch at B={B}: max_abs_err={max_err}")

    run_and_check(8)    # single-tile path (block == full batch)
    run_and_check(40)   # multi-step grid with a partial last tile

    print("KERNEL_OK")
</pallas_src>

<mosaic_0001>
module attributes {stable_mosaic.version = 11 : i64} {
  func.func @_tanh_mlp_kernel(%arg0: i32, %arg1: memref<8x32xbf16, #tpu.memory_space<vmem>>, %arg2: memref<8x16xbf16, #tpu.memory_space<vmem>>, %arg3: memref<16x32xbf16, #tpu.memory_space<vmem>>, %arg4: memref<1x32xf32, #tpu.memory_space<vmem>>, %arg5: memref<32x256xbf16, #tpu.memory_space<vmem>>, %arg6: memref<32x256xbf16, #tpu.memory_space<vmem>>, %arg7: memref<1x256xf32, #tpu.memory_space<vmem>>, %arg8: memref<256x256xbf16, #tpu.memory_space<vmem>>, %arg9: memref<1x256xf32, #tpu.memory_space<vmem>>, %arg10: memref<256x256xbf16, #tpu.memory_space<vmem>>, %arg11: memref<1x256xf32, #tpu.memory_space<vmem>>, %arg12: memref<256x128xbf16, #tpu.memory_space<vmem>>, %arg13: memref<1x128xf32, #tpu.memory_space<vmem>>, %arg14: memref<8x128xbf16, #tpu.memory_space<vmem>>) attributes {dimension_semantics = [#tpu.dimension_semantics<parallel>], iteration_bounds = array<i64: 1>, scalar_prefetch = 0 : i64, scratch_operands = 0 : i64, tpu.core_type = #tpu.core_type<tc>, window_params = [{transform_indices = @transform_0, window_bounds = array<i64: 8, 32>}, {transform_indices = @transform_1, window_bounds = array<i64: 8, 16>}, {pipeline_mode = #tpu.pipeline_mode<synchronous>, transform_indices = @transform_2, window_bounds = array<i64: 16, 32>}, {pipeline_mode = #tpu.pipeline_mode<synchronous>, transform_indices = @transform_3, window_bounds = array<i64: 1, 32>}, {pipeline_mode = #tpu.pipeline_mode<synchronous>, transform_indices = @transform_4, window_bounds = array<i64: 32, 256>}, {pipeline_mode = #tpu.pipeline_mode<synchronous>, transform_indices = @transform_5, window_bounds = array<i64: 32, 256>}, {pipeline_mode = #tpu.pipeline_mode<synchronous>, transform_indices = @transform_6, window_bounds = array<i64: 1, 256>}, {pipeline_mode = #tpu.pipeline_mode<synchronous>, transform_indices = @transform_7, window_bounds = array<i64: 256, 256>}, {pipeline_mode = #tpu.pipeline_mode<synchronous>, transform_indices = @transform_8, window_bounds = array<i64: 1, 256>}, {pipeline_mode = #tpu.pipeline_mode<synchronous>, transform_indices = @transform_9, window_bounds = array<i64: 256, 256>}, {pipeline_mode = #tpu.pipeline_mode<synchronous>, transform_indices = @transform_10, window_bounds = array<i64: 1, 256>}, {pipeline_mode = #tpu.pipeline_mode<synchronous>, transform_indices = @transform_11, window_bounds = array<i64: 256, 128>}, {pipeline_mode = #tpu.pipeline_mode<synchronous>, transform_indices = @transform_12, window_bounds = array<i64: 1, 128>}, {transform_indices = @transform_13, window_bounds = array<i64: 8, 128>}]} {
    %c0 = arith.constant 0 : index
    %c0_0 = arith.constant 0 : index
    %0 = vector.load %arg2[%c0, %c0_0] : memref<8x16xbf16, #tpu.memory_space<vmem>>, vector<8x16xbf16>
    %c0_1 = arith.constant 0 : index
    %c0_2 = arith.constant 0 : index
    %1 = vector.load %arg3[%c0_1, %c0_2] : memref<16x32xbf16, #tpu.memory_space<vmem>>, vector<16x32xbf16>
    %cst = arith.constant dense<0.000000e+00> : vector<8x32xf32>
    %2 = tpu.matmul %0, %1, %cst {dimension_numbers = #tpu.dot_dimension_numbers<[1], [0], [0], [1], [0, 0, 1, 1], [], []>} : vector<8x16xbf16>, vector<16x32xbf16>, vector<8x32xf32> -> vector<8x32xf32>
    %c0_3 = arith.constant 0 : index
    %c0_4 = arith.constant 0 : index
    %3 = vector.load %arg4[%c0_3, %c0_4] : memref<1x32xf32, #tpu.memory_space<vmem>>, vector<1x32xf32>
    %4 = vector.broadcast %3 : vector<1x32xf32> to vector<8x32xf32>
    %5 = arith.addf %2, %4 : vector<8x32xf32>
    %cst_5 = arith.constant 2.000000e+01 : f32
    %6 = vector.broadcast %cst_5 : f32 to vector<8x32xf32>
    %7 = arith.minimumf %5, %6 : vector<8x32xf32>
    %8 = math.exp %7 : vector<8x32xf32>
    %cst_6 = arith.constant 2.000000e+00 : f32
    %9 = vector.broadcast %cst_6 : f32 to vector<8x32xf32>
    %10 = arith.addf %8, %9 : vector<8x32xf32>
    %11 = arith.mulf %8, %10 : vector<8x32xf32>
    %cst_7 = arith.constant 2.000000e+00 : f32
    %12 = vector.broadcast %cst_7 : f32 to vector<8x32xf32>
    %13 = arith.addf %11, %12 : vector<8x32xf32>
    %14 = tpu.reciprocal %13 {approx = true} : vector<8x32xf32> -> vector<8x32xf32>
    %15 = arith.mulf %5, %11 : vector<8x32xf32>
    %16 = arith.mulf %15, %14 : vector<8x32xf32>
    %17 = arith.truncf %16 : vector<8x32xf32> to vector<8x32xbf16>
    %c0_8 = arith.constant 0 : index
    %c0_9 = arith.constant 0 : index
    %18 = vector.load %arg1[%c0_8, %c0_9] : memref<8x32xbf16, #tpu.memory_space<vmem>>, vector<8x32xbf16>
    %c0_10 = arith.constant 0 : index
    %c0_11 = arith.constant 0 : index
    %19 = vector.load %arg5[%c0_10, %c0_11] : memref<32x256xbf16, #tpu.memory_space<vmem>>, vector<32x256xbf16>
    %cst_12 = arith.constant dense<0.000000e+00> : vector<8x256xf32>
    %20 = tpu.matmul %18, %19, %cst_12 {dimension_numbers = #tpu.dot_dimension_numbers<[1], [0], [0], [1], [0, 0, 1, 1], [], []>} : vector<8x32xbf16>, vector<32x256xbf16>, vector<8x256xf32> -> vector<8x256xf32>
    %c0_13 = arith.constant 0 : index
    %c0_14 = arith.constant 0 : index
    %21 = vector.load %arg6[%c0_13, %c0_14] : memref<32x256xbf16, #tpu.memory_space<vmem>>, vector<32x256xbf16>
    %cst_15 = arith.constant dense<0.000000e+00> : vector<8x256xf32>
    %22 = tpu.matmul %17, %21, %cst_15 {dimension_numbers = #tpu.dot_dimension_numbers<[1], [0], [0], [1], [0, 0, 1, 1], [], []>} : vector<8x32xbf16>, vector<32x256xbf16>, vector<8x256xf32> -> vector<8x256xf32>
    %23 = arith.addf %20, %22 : vector<8x256xf32>
    %c0_16 = arith.constant 0 : index
    %c0_17 = arith.constant 0 : index
    %24 = vector.load %arg7[%c0_16, %c0_17] : memref<1x256xf32, #tpu.memory_space<vmem>>, vector<1x256xf32>
    %25 = vector.broadcast %24 : vector<1x256xf32> to vector<8x256xf32>
    %26 = arith.addf %23, %25 : vector<8x256xf32>
    %cst_18 = arith.constant 2.000000e+01 : f32
    %27 = vector.broadcast %cst_18 : f32 to vector<8x256xf32>
    %28 = arith.minimumf %26, %27 : vector<8x256xf32>
    %29 = math.exp %28 : vector<8x256xf32>
    %cst_19 = arith.constant 2.000000e+00 : f32
    %30 = vector.broadcast %cst_19 : f32 to vector<8x256xf32>
    %31 = arith.addf %29, %30 : vector<8x256xf32>
    %32 = arith.mulf %29, %31 : vector<8x256xf32>
    %cst_20 = arith.constant 2.000000e+00 : f32
    %33 = vector.broadcast %cst_20 : f32 to vector<8x256xf32>
    %34 = arith.addf %32, %33 : vector<8x256xf32>
    %35 = tpu.reciprocal %34 {approx = true} : vector<8x256xf32> -> vector<8x256xf32>
    %36 = arith.mulf %26, %32 : vector<8x256xf32>
    %37 = arith.mulf %36, %35 : vector<8x256xf32>
    %38 = arith.truncf %37 : vector<8x256xf32> to vector<8x256xbf16>
    %c0_21 = arith.constant 0 : index
    %c0_22 = arith.constant 0 : index
    %39 = vector.load %arg8[%c0_21, %c0_22] : memref<256x256xbf16, #tpu.memory_space<vmem>>, vector<256x256xbf16>
    %cst_23 = arith.constant dense<0.000000e+00> : vector<8x256xf32>
    %40 = tpu.matmul %38, %39, %cst_23 {dimension_numbers = #tpu.dot_dimension_numbers<[1], [0], [0], [1], [0, 0, 1, 1], [], []>} : vector<8x256xbf16>, vector<256x256xbf16>, vector<8x256xf32> -> vector<8x256xf32>
    %c0_24 = arith.constant 0 : index
    %c0_25 = arith.constant 0 : index
    %41 = vector.load %arg9[%c0_24, %c0_25] : memref<1x256xf32, #tpu.memory_space<vmem>>, vector<1x256xf32>
    %42 = vector.broadcast %41 : vector<1x256xf32> to vector<8x256xf32>
    %43 = arith.addf %40, %42 : vector<8x256xf32>
    %cst_26 = arith.constant 2.000000e+01 : f32
    %44 = vector.broadcast %cst_26 : f32 to vector<8x256xf32>
    %45 = arith.minimumf %43, %44 : vector<8x256xf32>
    %46 = math.exp %45 : vector<8x256xf32>
    %cst_27 = arith.constant 2.000000e+00 : f32
    %47 = vector.broadcast %cst_27 : f32 to vector<8x256xf32>
    %48 = arith.addf %46, %47 : vector<8x256xf32>
    %49 = arith.mulf %46, %48 : vector<8x256xf32>
    %cst_28 = arith.constant 2.000000e+00 : f32
    %50 = vector.broadcast %cst_28 : f32 to vector<8x256xf32>
    %51 = arith.addf %49, %50 : vector<8x256xf32>
    %52 = tpu.reciprocal %51 {approx = true} : vector<8x256xf32> -> vector<8x256xf32>
    %53 = arith.mulf %43, %49 : vector<8x256xf32>
    %54 = arith.mulf %53, %52 : vector<8x256xf32>
    %55 = arith.truncf %54 : vector<8x256xf32> to vector<8x256xbf16>
    %c0_29 = arith.constant 0 : index
    %c0_30 = arith.constant 0 : index
    %56 = vector.load %arg10[%c0_29, %c0_30] : memref<256x256xbf16, #tpu.memory_space<vmem>>, vector<256x256xbf16>
    %cst_31 = arith.constant dense<0.000000e+00> : vector<8x256xf32>
    %57 = tpu.matmul %55, %56, %cst_31 {dimension_numbers = #tpu.dot_dimension_numbers<[1], [0], [0], [1], [0, 0, 1, 1], [], []>} : vector<8x256xbf16>, vector<256x256xbf16>, vector<8x256xf32> -> vector<8x256xf32>
    %c0_32 = arith.constant 0 : index
    %c0_33 = arith.constant 0 : index
    %58 = vector.load %arg11[%c0_32, %c0_33] : memref<1x256xf32, #tpu.memory_space<vmem>>, vector<1x256xf32>
    %59 = vector.broadcast %58 : vector<1x256xf32> to vector<8x256xf32>
    %60 = arith.addf %57, %59 : vector<8x256xf32>
    %cst_34 = arith.constant 2.000000e+01 : f32
    %61 = vector.broadcast %cst_34 : f32 to vector<8x256xf32>
    %62 = arith.minimumf %60, %61 : vector<8x256xf32>
    %63 = math.exp %62 : vector<8x256xf32>
    %cst_35 = arith.constant 2.000000e+00 : f32
    %64 = vector.broadcast %cst_35 : f32 to vector<8x256xf32>
    %65 = arith.addf %63, %64 : vector<8x256xf32>
    %66 = arith.mulf %63, %65 : vector<8x256xf32>
    %cst_36 = arith.constant 2.000000e+00 : f32
    %67 = vector.broadcast %cst_36 : f32 to vector<8x256xf32>
    %68 = arith.addf %66, %67 : vector<8x256xf32>
    %69 = tpu.reciprocal %68 {approx = true} : vector<8x256xf32> -> vector<8x256xf32>
    %70 = arith.mulf %60, %66 : vector<8x256xf32>
    %71 = arith.mulf %70, %69 : vector<8x256xf32>
    %72 = arith.truncf %71 : vector<8x256xf32> to vector<8x256xbf16>
    %c0_37 = arith.constant 0 : index
    %c0_38 = arith.constant 0 : index
    %73 = vector.load %arg12[%c0_37, %c0_38] : memref<256x128xbf16, #tpu.memory_space<vmem>>, vector<256x128xbf16>
    %cst_39 = arith.constant dense<0.000000e+00> : vector<8x128xf32>
    %74 = tpu.matmul %72, %73, %cst_39 {dimension_numbers = #tpu.dot_dimension_numbers<[1], [0], [0], [1], [0, 0, 1, 1], [], []>} : vector<8x256xbf16>, vector<256x128xbf16>, vector<8x128xf32> -> vector<8x128xf32>
    %c0_40 = arith.constant 0 : index
    %c0_41 = arith.constant 0 : index
    %75 = vector.load %arg13[%c0_40, %c0_41] : memref<1x128xf32, #tpu.memory_space<vmem>>, vector<1x128xf32>
    %76 = vector.broadcast %75 : vector<1x128xf32> to vector<8x128xf32>
    %77 = arith.addf %74, %76 : vector<8x128xf32>
    %78 = math.tanh %77 : vector<8x128xf32>
    %cst_42 = arith.constant 2.000000e+00 : f32
    %79 = vector.broadcast %cst_42 : f32 to vector<8x128xf32>
    %80 = arith.mulf %78, %79 : vector<8x128xf32>
    %81 = arith.truncf %80 : vector<8x128xf32> to vector<8x128xbf16>
    %c0_43 = arith.constant 0 : index
    %c0_44 = arith.constant 0 : index
    %82 = vector.load %arg14[%c0_43, %c0_44] : memref<8x128xbf16, #tpu.memory_space<vmem>>, vector<8x128xbf16>
    tpu.vector_store %arg14[%c0_43, %c0_44], %81 {strides = array<i32>} : memref<8x128xbf16, #tpu.memory_space<vmem>>, vector<8x128xbf16>,
    return
  }
  func.func @transform_0(%arg0: i32) -> (i32, i32) {
    %c0_i32 = arith.constant 0 : i32
    %c0_i32_0 = arith.constant 0 : i32
    return %arg0, %c0_i32 : i32, i32
  }
  func.func @transform_1(%arg0: i32) -> (i32, i32) {
    %c0_i32 = arith.constant 0 : i32
    %c0_i32_0 = arith.constant 0 : i32
    return %arg0, %c0_i32 : i32, i32
  }
  func.func @transform_2(%arg0: i32) -> (i32, i32) {
    %c0_i32 = arith.constant 0 : i32
    %c0_i32_0 = arith.constant 0 : i32
    %c0_i32_1 = arith.constant 0 : i32
    return %c0_i32, %c0_i32_0 : i32, i32
  }
  func.func @transform_3(%arg0: i32) -> (i32, i32) {
    %c0_i32 = arith.constant 0 : i32
    %c0_i32_0 = arith.constant 0 : i32
    %c0_i32_1 = arith.constant 0 : i32
    return %c0_i32, %c0_i32_0 : i32, i32
  }
  func.func @transform_4(%arg0: i32) -> (i32, i32) {
    %c0_i32 = arith.constant 0 : i32
    %c0_i32_0 = arith.constant 0 : i32
    %c0_i32_1 = arith.constant 0 : i32
    return %c0_i32, %c0_i32_0 : i32, i32
  }
  func.func @transform_5(%arg0: i32) -> (i32, i32) {
    %c0_i32 = arith.constant 0 : i32
    %c0_i32_0 = arith.constant 0 : i32
    %c0_i32_1 = arith.constant 0 : i32
    return %c0_i32, %c0_i32_0 : i32, i32
  }
  func.func @transform_6(%arg0: i32) -> (i32, i32) {
    %c0_i32 = arith.constant 0 : i32
    %c0_i32_0 = arith.constant 0 : i32
    %c0_i32_1 = arith.constant 0 : i32
    return %c0_i32, %c0_i32_0 : i32, i32
  }
  func.func @transform_7(%arg0: i32) -> (i32, i32) {
    %c0_i32 = arith.constant 0 : i32
    %c0_i32_0 = arith.constant 0 : i32
    %c0_i32_1 = arith.constant 0 : i32
    return %c0_i32, %c0_i32_0 : i32, i32
  }
  func.func @transform_8(%arg0: i32) -> (i32, i32) {
    %c0_i32 = arith.constant 0 : i32
    %c0_i32_0 = arith.constant 0 : i32
    %c0_i32_1 = arith.constant 0 : i32
    return %c0_i32, %c0_i32_0 : i32, i32
  }
  func.func @transform_9(%arg0: i32) -> (i32, i32) {
    %c0_i32 = arith.constant 0 : i32
    %c0_i32_0 = arith.constant 0 : i32
    %c0_i32_1 = arith.constant 0 : i32
    return %c0_i32, %c0_i32_0 : i32, i32
  }
  func.func @transform_10(%arg0: i32) -> (i32, i32) {
    %c0_i32 = arith.constant 0 : i32
    %c0_i32_0 = arith.constant 0 : i32
    %c0_i32_1 = arith.constant 0 : i32
    return %c0_i32, %c0_i32_0 : i32, i32
  }
  func.func @transform_11(%arg0: i32) -> (i32, i32) {
    %c0_i32 = arith.constant 0 : i32
    %c0_i32_0 = arith.constant 0 : i32
    %c0_i32_1 = arith.constant 0 : i32
    return %c0_i32, %c0_i32_0 : i32, i32
  }
  func.func @transform_12(%arg0: i32) -> (i32, i32) {
    %c0_i32 = arith.constant 0 : i32
    %c0_i32_0 = arith.constant 0 : i32
    %c0_i32_1 = arith.constant 0 : i32
    return %c0_i32, %c0_i32_0 : i32, i32
  }
  func.func @transform_13(%arg0: i32) -> (i32, i32) {
    %c0_i32 = arith.constant 0 : i32
    %c0_i32_0 = arith.constant 0 : i32
    return %arg0, %c0_i32 : i32, i32
  }
}

</mosaic_0001>

<llo_original>
// kernel: tpu_custom_call.1
$region0: #{tpu_custom_call.1}
  #allocation0 [shape = 'u32[]', space=smem, size = 0x4, offset = 0x4, fixed_abs, tag = 'smem constant byte address 0x4 - core index']
  #allocation1 [shape = 'u32[144,128]{1,0:T(1,128)}', space=vmem, size = 0x12000, scoped, tag = 'internal scratch']
  %s0 = inlined_call_operand.hbm [shape: bf16[8,32], index: 0, kind: input, shape index: {}]
  %s1 = inlined_call_operand.hbm [shape: bf16[8,16], index: 1, kind: input, shape index: {}]
  %s2 = inlined_call_operand.hbm [shape: bf16[16,32], index: 2, kind: input, shape index: {}]
  %s3 = inlined_call_operand.vmem [shape: f32[1,32], index: 3, kind: input, shape index: {}]
  %s4 = inlined_call_operand.hbm [shape: bf16[32,256], index: 4, kind: input, shape index: {}]
  %s5 = inlined_call_operand.hbm [shape: bf16[32,256], index: 5, kind: input, shape index: {}]
  %s6 = inlined_call_operand.vmem [shape: f32[1,256], index: 6, kind: input, shape index: {}]
  %s7 = inlined_call_operand.hbm [shape: bf16[256,256], index: 7, kind: input, shape index: {}]
  %s8 = inlined_call_operand.vmem [shape: f32[1,256], index: 8, kind: input, shape index: {}]
  %s9 = inlined_call_operand.hbm [shape: bf16[256,256], index: 9, kind: input, shape index: {}]
  %s10 = inlined_call_operand.vmem [shape: f32[1,256], index: 10, kind: input, shape index: {}]
  %s11 = inlined_call_operand.hbm [shape: bf16[256,128], index: 11, kind: input, shape index: {}]
  %s12 = inlined_call_operand.vmem [shape: f32[1,128], index: 12, kind: input, shape index: {}]
  %s13 = inlined_call_operand.hbm [shape: bf16[8,128], index: 13, kind: output, shape index: {}]
  %s14 = sld [smem:[#allocation0]]
  $region94: #{tpu_custom_call.1} parent=0
    _
  %s16 = ssub.s32 1, %s14
  %s17 = scalar_select 0, %s16, %s14
  $region1: #{tpu_custom_call.1} parent=0
    #allocation2 [shape = 'u8[2048]{0}', space=vmem, size = 0x800, scoped, tag = 'input window, operand 0, single buffered']
    #allocation3 [shape = 's32[1]{0}', space=sflag, size = 0x4, scoped, tag = 'scoped memory for tpu_custom_call.1']
    #allocation4 [shape = 's32[1]{0}', space=sflag, size = 0x4, scoped, tag = 'scoped memory for tpu_custom_call.1']
    #allocation5 [shape = 'u8[2048]{0}', space=vmem, size = 0x800, scoped, tag = 'input window, operand 1, single buffered']
    #allocation6 [shape = 's32[1]{0}', space=sflag, size = 0x4, scoped, tag = 'scoped memory for tpu_custom_call.1']
    #allocation7 [shape = 'u8[4096]{0}', space=vmem, size = 0x1000, scoped, tag = 'input window, operand 2, single buffered']
    #allocation8 [shape = 'u8[16384]{0}', space=vmem, size = 0x4000, scoped, tag = 'input window, operand 4, single buffered']
    #allocation9 [shape = 's32[1]{0}', space=sflag, size = 0x4, scoped, tag = 'scoped memory for tpu_custom_call.1']
    #allocation10 [shape = 'u8[16384]{0}', space=vmem, size = 0x4000, scoped, tag = 'input window, operand 5, single buffered']
    #allocation11 [shape = 'u8[131072]{0}', space=vmem, size = 0x20000, scoped, tag = 'input window, operand 7, single buffered']
    #allocation12 [shape = 's32[1]{0}', space=sflag, size = 0x4, scoped, tag = 'scoped memory for tpu_custom_call.1']
    #allocation13 [shape = 'u8[131072]{0}', space=vmem, size = 0x20000, scoped, tag = 'input window, operand 9, single buffered']
    #allocation14 [shape = 'u8[65536]{0}', space=vmem, size = 0x10000, scoped, tag = 'input window, operand 11, single buffered']
    #allocation15 [shape = 's32[1]{0}', space=sflag, size = 0x4, scoped, tag = 'scoped memory for tpu_custom_call.1']
    #allocation16 [shape = 'u8[2048]{0}', space=vmem, size = 0x800, scoped, tag = 'output window, operand 0, single buffered']
    %18 = vsyncpa [#allocation3], 0
    %19 = vsyncpa [#allocation6], 0
    %20 = vsyncpa [#allocation9], 0
    %21 = vsyncpa [#allocation12], 0
    %22 = vsyncpa [#allocation15], 0
    %23 = vsyncpa [#allocation4], 0
    // Predicated region
    $region2: #{tpu_custom_call.1} parent=1 // pred_check
      _
    $region3: #{tpu_custom_call.1} parent=1 // pred_check_branch
      %25 = sbr.rel (0) target = $region5
    $region4: #{tpu_custom_call.1} parent=1 // pred_region
      %s27 = ssub.s32 64, 64
      %28 = vsyncadd [#allocation3], %s27
      %s30 = sshll.u32 [#allocation2], 4
      %s31 = int_to_ptr.vmem [resolvable:$true] %s30
      %33 = dma.hbm_to_vmem [thread:$0]  %s0, 64, %s31, [#allocation3]
    $region5: #{tpu_custom_call.1} parent=1 // pred_fallthru
      _
    // Predicated region
    $region6: #{tpu_custom_call.1} parent=1 // pred_check
      _
    $region7: #{tpu_custom_call.1} parent=1 // pred_check_branch
      %35 = sbr.rel (0) target = $region9
    $region8: #{tpu_custom_call.1} parent=1 // pred_region
      %s37 = ssub.s32 64, 64
      %38 = vsyncadd [#allocation6], %s37
      %s40 = sshll.u32 [#allocation5], 4
      %s41 = int_to_ptr.vmem [resolvable:$true] %s40
      %43 = dma.hbm_to_vmem [thread:$0]  %s1, 64, %s41, [#allocation6]
    $region9: #{tpu_custom_call.1} parent=1 // pred_fallthru
      _
    // Predicated region
    $region10: #{tpu_custom_call.1} parent=1 // pred_check
      _
    $region11: #{tpu_custom_call.1} parent=1 // pred_check_branch
      %45 = sbr.rel (0) target = $region13
    $region12: #{tpu_custom_call.1} parent=1 // pred_region
      %s47 = ssub.s32 128, 128
      %48 = vsyncadd [#allocation6], %s47
      %s49 = sshll.u32 [#allocation7], 4
      %s50 = int_to_ptr.vmem [resolvable:$true] %s49
      %55 = dma.hbm_to_vmem [thread:$0]  %s2, 128, %s50, [#allocation6], 64, 64, 4
    $region13: #{tpu_custom_call.1} parent=1 // pred_fallthru
      _
    // Predicated region
    $region14: #{tpu_custom_call.1} parent=1 // pred_check
      _
    $region15: #{tpu_custom_call.1} parent=1 // pred_check_branch
      %57 = sbr.rel (0) target = $region17
    $region16: #{tpu_custom_call.1} parent=1 // pred_region
      _
    $region17: #{tpu_custom_call.1} parent=1 // pred_fallthru
      _
    // Predicated region
    $region18: #{tpu_custom_call.1} parent=1 // pred_check
      _
    $region19: #{tpu_custom_call.1} parent=1 // pred_check_branch
      %59 = sbr.rel (0) target = $region21
    $region20: #{tpu_custom_call.1} parent=1 // pred_region
      %s61 = ssub.s32 512, 512
      %62 = vsyncadd [#allocation9], %s61
      %s63 = sshll.u32 [#allocation8], 4
      %s64 = int_to_ptr.vmem [resolvable:$true] %s63
      %69 = dma.hbm_to_vmem [thread:$0]  %s4, 512, %s64, [#allocation9], 128, 128, 8
    $region21: #{tpu_custom_call.1} parent=1 // pred_fallthru
      _
    // Predicated region
    $region22: #{tpu_custom_call.1} parent=1 // pred_check
      _
    $region23: #{tpu_custom_call.1} parent=1 // pred_check_branch
      %71 = sbr.rel (0) target = $region25
    $region24: #{tpu_custom_call.1} parent=1 // pred_region
      %s73 = ssub.s32 512, 512
      %74 = vsyncadd [#allocation9], %s73
      %s75 = sshll.u32 [#allocation10], 4
      %s76 = int_to_ptr.vmem [resolvable:$true] %s75
      %81 = dma.hbm_to_vmem [thread:$0]  %s5, 512, %s76, [#allocation9], 128, 128, 8
    $region25: #{tpu_custom_call.1} parent=1 // pred_fallthru
      _
    // Predicated region
    $region26: #{tpu_custom_call.1} parent=1 // pred_check
      _
    $region27: #{tpu_custom_call.1} parent=1 // pred_check_branch
      %83 = sbr.rel (0) target = $region29
    $region28: #{tpu_custom_call.1} parent=1 // pred_region
      _
    $region29: #{tpu_custom_call.1} parent=1 // pred_fallthru
      _
    // Predicated region
    $region30: #{tpu_custom_call.1} parent=1 // pred_check
      _
    $region31: #{tpu_custom_call.1} parent=1 // pred_check_branch
      %85 = sbr.rel (0) target = $region33
    $region32: #{tpu_custom_call.1} parent=1 // pred_region
      %s87 = ssub.s32 4096, 4096
      %88 = vsyncadd [#allocation12], %s87
      %s89 = sshll.u32 [#allocation11], 4
      %s90 = int_to_ptr.vmem [resolvable:$true] %s89
      %95 = dma.hbm_to_vmem [thread:$0]  %s7, 4096, %s90, [#allocation12], 128, 128, 8
    $region33: #{tpu_custom_call.1} parent=1 // pred_fallthru
      _
    // Predicated region
    $region34: #{tpu_custom_call.1} parent=1 // pred_check
      _
    $region35: #{tpu_custom_call.1} parent=1 // pred_check_branch
      %97 = sbr.rel (0) target = $region37
    $region36: #{tpu_custom_call.1} parent=1 // pred_region
      _
    $region37: #{tpu_custom_call.1} parent=1 // pred_fallthru
      _
    // Predicated region
    $region38: #{tpu_custom_call.1} parent=1 // pred_check
      _
    $region39: #{tpu_custom_call.1} parent=1 // pred_check_branch
      %99 = sbr.rel (0) target = $region41
    $region40: #{tpu_custom_call.1} parent=1 // pred_region
      %s101 = ssub.s32 4096, 4096
      %102 = vsyncadd [#allocation12], %s101
      %s103 = sshll.u32 [#allocation13], 4
      %s104 = int_to_ptr.vmem [resolvable:$true] %s103
      %109 = dma.hbm_to_vmem [thread:$0]  %s9, 4096, %s104, [#allocation12], 128, 128, 8
    $region41: #{tpu_custom_call.1} parent=1 // pred_fallthru
      _
    // Predicated region
    $region42: #{tpu_custom_call.1} parent=1 // pred_check
      _
    $region43: #{tpu_custom_call.1} parent=1 // pred_check_branch
      %111 = sbr.rel (0) target = $region45
    $region44: #{tpu_custom_call.1} parent=1 // pred_region
      _
    $region45: #{tpu_custom_call.1} parent=1 // pred_fallthru
      _
    // Predicated region
    $region46: #{tpu_custom_call.1} parent=1 // pred_check
      _
    $region47: #{tpu_custom_call.1} parent=1 // pred_check_branch
      %113 = sbr.rel (0) target = $region49
    $region48: #{tpu_custom_call.1} parent=1 // pred_region
      %s115 = ssub.s32 2048, 2048
      %116 = vsyncadd [#allocation15], %s115
      %s117 = sshll.u32 [#allocation14], 4
      %s118 = int_to_ptr.vmem [resolvable:$true] %s117
      %123 = dma.hbm_to_vmem [thread:$0]  %s11, 2048, %s118, [#allocation15], 64, 64, 4
    $region49: #{tpu_custom_call.1} parent=1 // pred_fallthru
      _
    // Predicated region
    $region50: #{tpu_custom_call.1} parent=1 // pred_check
      _
    $region51: #{tpu_custom_call.1} parent=1 // pred_check_branch
      %125 = sbr.rel (0) target = $region53
    $region52: #{tpu_custom_call.1} parent=1 // pred_region
      _
    $region53: #{tpu_custom_call.1} parent=1 // pred_fallthru
      _
    // Predicated region
    $region54: #{tpu_custom_call.1} parent=1 // pred_check
      _
    $region55: #{tpu_custom_call.1} parent=1 // pred_check_branch
      %127 = sbr.rel (0) target = $region57
    $region56: #{tpu_custom_call.1} parent=1 // pred_region
      %128 = dma.done [#allocation3], 64
    $region57: #{tpu_custom_call.1} parent=1 // pred_fallthru
      _
    // Predicated region
    $region58: #{tpu_custom_call.1} parent=1 // pred_check
      _
    $region59: #{tpu_custom_call.1} parent=1 // pred_check_branch
      %130 = sbr.rel (0) target = $region61
    $region60: #{tpu_custom_call.1} parent=1 // pred_region
      %131 = dma.done [#allocation6], 64
    $region61: #{tpu_custom_call.1} parent=1 // pred_fallthru
      _
    // Predicated region
    $region62: #{tpu_custom_call.1} parent=1 // pred_check
      _
    $region63: #{tpu_custom_call.1} parent=1 // pred_check_branch
      %133 = sbr.rel (0) target = $region65
    $region64: #{tpu_custom_call.1} parent=1 // pred_region
      %134 = dma.done [#allocation6], 128
    $region65: #{tpu_custom_call.1} parent=1 // pred_fallthru
      _
    // Predicated region
    $region66: #{tpu_custom_call.1} parent=1 // pred_check
      _
    $region67: #{tpu_custom_call.1} parent=1 // pred_check_branch
      %136 = sbr.rel (0) target = $region69
    $region68: #{tpu_custom_call.1} parent=1 // pred_region
      %137 = dma.done [#allocation9], 512
    $region69: #{tpu_custom_call.1} parent=1 // pred_fallthru
      _
    // Predicated region
    $region70: #{tpu_custom_call.1} parent=1 // pred_check
      _
    $region71: #{tpu_custom_call.1} parent=1 // pred_check_branch
      %139 = sbr.rel (0) target = $region73
    $region72: #{tpu_custom_call.1} parent=1 // pred_region
      %140 = dma.done [#allocation9], 512
    $region73: #{tpu_custom_call.1} parent=1 // pred_fallthru
      _
    // Predicated region
    $region74: #{tpu_custom_call.1} parent=1 // pred_check
      _
    $region75: #{tpu_custom_call.1} parent=1 // pred_check_branch
      %142 = sbr.rel (0) target = $region77
    $region76: #{tpu_custom_call.1} parent=1 // pred_region
      %143 = dma.done [#allocation12], 4096
    $region77: #{tpu_custom_call.1} parent=1 // pred_fallthru
      _
    // Predicated region
    $region78: #{tpu_custom_call.1} parent=1 // pred_check
      _
    $region79: #{tpu_custom_call.1} parent=1 // pred_check_branch
      %145 = sbr.rel (0) target = $region81
    $region80: #{tpu_custom_call.1} parent=1 // pred_region
      %146 = dma.done [#allocation12], 4096
    $region81: #{tpu_custom_call.1} parent=1 // pred_fallthru
      _
    // Predicated region
    $region82: #{tpu_custom_call.1} parent=1 // pred_check
      _
    $region83: #{tpu_custom_call.1} parent=1 // pred_check_branch
      %148 = sbr.rel (0) target = $region85
    $region84: #{tpu_custom_call.1} parent=1 // pred_region
      %149 = dma.done [#allocation15], 2048
    $region85: #{tpu_custom_call.1} parent=1 // pred_fallthru
      _
    %v151 = vld [vmem:[#allocation5] sm:$0xf]
    %v152 = vld [vmem:[#allocation7] sm:$0xf]
    %v153 = vld [vmem:[#allocation7 + $0x4] sm:$0xf]
    %v154 = vld [vmem:[%s3] sm:$0x1]
    %v156 = vlaneseq
    %v157 = vshrl.u32 %v156, 7
    %v158 = vsub.s32 0, %v157
    %v159 = vrot.slane %v154, %v158
    %v163 = vunpack.c.l.b16 %v152
    %v164 = vunpack.c.l.b16 %v153
    %v165 = vpack.c.b16 %v164, %v163
    %vm167 = vcmask 130048
    %v169 = vsel %vm167, %v151, 0
    %171 = vmatprep.subr.bf16.mxu0 0
    %172 = vmatpush1.bf16.msra.mxu0 0
    %173 = vmatprep.subr.bf16.mxu0 0
    %174 = vmatpush1.bf16.msra.mxu0 0
    %175 = vmatprep.subr.bf16.mxu0 0
    %176 = vmatpush1.bf16.msra.mxu0 0
    %177 = vmatprep.subr.bf16.mxu0 0
    %178 = vmatpush1.bf16.msra.mxu0 0
    %179 = vmatprep.subr.bf16.mxu0 0
    %180 = vmatpush1.bf16.msra.mxu0 0
    %181 = vmatprep.subr.bf16.mxu0 0
    %182 = vmatpush1.bf16.msra.mxu0 0
    %183 = vmatprep.subr.bf16.mxu0 0
    %184 = vmatpush1.bf16.msra.mxu0 0
    %185 = vmatprep.subr.bf16.mxu0 0
    %186 = vmatpush1.bf16.msra.mxu0 %v165
    %187 = vmatprep.subr.bf16.mxu0 0
    %188 = vmatpush2.bf16.msra.mxu0 0
    %189 = vmatprep.subr.bf16.mxu0 0
    %190 = vmatpush2.bf16.msra.mxu0 0
    %191 = vmatprep.subr.bf16.mxu0 0
    %192 = vmatpush2.bf16.msra.mxu0 0
    %193 = vmatprep.subr.bf16.mxu0 0
    %194 = vmatpush2.bf16.msra.mxu0 0
    %195 = vmatprep.subr.bf16.mxu0 0
    %196 = vmatpush2.bf16.msra.mxu0 0
    %197 = vmatprep.subr.bf16.mxu0 0
    %198 = vmatpush2.bf16.msra.mxu0 0
    %199 = vmatprep.subr.bf16.mxu0 0
    %200 = vmatpush2.bf16.msra.mxu0 0
    %201 = vmatprep.subr.bf16.mxu0 0
    %202 = vmatpush2.bf16.msra.mxu0 0
    %203 = vmatprep.mubr.bf16.mxu0 0
    %204 = vmatmul.mubr.bf16.gmra.mxu0 %v169
    %v205 = vpop.f32.mrf.mxu0
    %v206 = vadd.f32 %v159, %v205
    %v207 = vpop.f32.mrf.mxu0
    %v208 = vpop.f32.mrf.mxu0
    %v209 = vpop.f32.mrf.mxu0
    %210 = vdwg.mxu0
    %v211 = vmin.f32 %v206, 20.0
    %v212 = vmul.f32 %v211, 1.442695
    %v213 = vpow.pop %v212
    %v214 = vadd.f32 %v213, 2.0
    %v215 = vmul.f32 %v213, %v214
    %v216 = vadd.f32 %v215, 2.0
    %v217 = vrcp.pop %v216
    %v218 = vmul.f32 %v206, %v215
    %v219 = vmul.f32 %v218, %v217
    %v220 = vpack.c.bf16 %v219, %v219
    %v221 = vld [vmem:[#allocation2] sm:$0xf]
    %v222 = vld [vmem:[#allocation8] sm:$0xff]
    %v223 = vld [vmem:[#allocation8 + $0x8] sm:$0xff]
    %v224 = vld [vmem:[#allocation8 + $0x10] sm:$0xff]
    %v225 = vld [vmem:[#allocation8 + $0x18] sm:$0xff]
    %v226 = vld [vmem:[#allocation10] sm:$0xff]
    %v227 = vld [vmem:[#allocation10 + $0x8] sm:$0xff]
    %v228 = vld [vmem:[#allocation10 + $0x10] sm:$0xff]
    %v229 = vld [vmem:[#allocation10 + $0x18] sm:$0xff]
    %v234 = vunpack.c.l.b16 %v226
    %v235 = vunpack.c.h.b16 %v226
    %v236 = vunpack.c.l.b16 %v227
    %v237 = vunpack.c.h.b16 %v227
    %v238 = vunpack.c.l.b16 %v228
    %v239 = vunpack.c.h.b16 %v228
    %v240 = vunpack.c.l.b16 %v229
    %v241 = vunpack.c.h.b16 %v229
    %v242 = vpack.c.b16 %v236, %v234
    %v243 = vpack.c.b16 %v237, %v235
    %v244 = vpack.c.b16 %v240, %v238
    %v245 = vpack.c.b16 %v241, %v239
    %vm250 = vcmask 261120
    %v252 = vsel %vm250, %v220, 0
    %254 = vmatprep.subr.bf16.mxu0 0
    %255 = vmatpush1.bf16.msra.mxu0 0
    %256 = vmatprep.subr.bf16.mxu0 0
    %257 = vmatpush1.bf16.msra.mxu0 0
    %258 = vmatprep.subr.bf16.mxu0 0
    %259 = vmatpush1.bf16.msra.mxu0 0
    %260 = vmatprep.subr.bf16.mxu0 0
    %261 = vmatpush1.bf16.msra.mxu0 0
    %262 = vmatprep.subr.bf16.mxu0 0
    %263 = vmatpush1.bf16.msra.mxu0 0
    %264 = vmatprep.subr.bf16.mxu0 0
    %265 = vmatpush1.bf16.msra.mxu0 0
    %266 = vmatprep.subr.bf16.mxu0 %v245
    %267 = vmatpush1.bf16.msra.mxu0 %v244
    %268 = vmatprep.subr.bf16.mxu0 %v243
    %269 = vmatpush1.bf16.msra.mxu0 %v242
    %270 = vmatprep.subr.bf16.mxu0 0
    %271 = vmatpush2.bf16.msra.mxu0 0
    %272 = vmatprep.subr.bf16.mxu0 0
    %273 = vmatpush2.bf16.msra.mxu0 0
    %274 = vmatprep.subr.bf16.mxu0 0
    %275 = vmatpush2.bf16.msra.mxu0 0
    %276 = vmatprep.subr.bf16.mxu0 0
    %277 = vmatpush2.bf16.msra.mxu0 0
    %278 = vmatprep.subr.bf16.mxu0 0
    %279 = vmatpush2.bf16.msra.mxu0 0
    %280 = vmatprep.subr.bf16.mxu0 0
    %281 = vmatpush2.bf16.msra.mxu0 0
    %282 = vmatprep.subr.bf16.mxu0 0
    %283 = vmatpush2.bf16.msra.mxu0 0
    %284 = vmatprep.subr.bf16.mxu0 0
    %285 = vmatpush2.bf16.msra.mxu0 0
    %286 = vmatprep.mubr.bf16.mxu0 0
    %287 = vmatmul.mubr.bf16.gmra.mxu0 %v252
    %v288 = vpop.f32.mrf.mxu0
    %v289 = vadd.f32 0.0, %v288
    %v290 = vpop.f32.mrf.mxu0
    %v291 = vadd.f32 0.0, %v290
    %v292 = vpop.f32.mrf.mxu0
    %v293 = vpop.f32.mrf.mxu0
    %294 = vdwg.mxu0
    %v299 = vunpack.c.l.b16 %v222
    %v300 = vunpack.c.h.b16 %v222
    %v301 = vunpack.c.l.b16 %v223
    %v302 = vunpack.c.h.b16 %v223
    %v303 = vunpack.c.l.b16 %v224
    %v304 = vunpack.c.h.b16 %v224
    %v305 = vunpack.c.l.b16 %v225
    %v306 = vunpack.c.h.b16 %v225
    %v307 = vpack.c.b16 %v301, %v299
    %v308 = vpack.c.b16 %v302, %v300
    %v309 = vpack.c.b16 %v305, %v303
    %v310 = vpack.c.b16 %v306, %v304
    %v316 = vsel %vm250, %v221, 0
    %318 = vmatprep.subr.bf16.mxu0 0
    %319 = vmatpush1.bf16.msra.mxu0 0
    %320 = vmatprep.subr.bf16.mxu0 0
    %321 = vmatpush1.bf16.msra.mxu0 0
    %322 = vmatprep.subr.bf16.mxu0 0
    %323 = vmatpush1.bf16.msra.mxu0 0
    %324 = vmatprep.subr.bf16.mxu0 0
    %325 = vmatpush1.bf16.msra.mxu0 0
    %326 = vmatprep.subr.bf16.mxu0 0
    %327 = vmatpush1.bf16.msra.mxu0 0
    %328 = vmatprep.subr.bf16.mxu0 0
    %329 = vmatpush1.bf16.msra.mxu0 0
    %330 = vmatprep.subr.bf16.mxu0 %v310
    %331 = vmatpush1.bf16.msra.mxu0 %v309
    %332 = vmatprep.subr.bf16.mxu0 %v308
    %333 = vmatpush1.bf16.msra.mxu0 %v307
    %334 = vmatprep.subr.bf16.mxu0 0
    %335 = vmatpush2.bf16.msra.mxu0 0
    %336 = vmatprep.subr.bf16.mxu0 0
    %337 = vmatpush2.bf16.msra.mxu0 0
    %338 = vmatprep.subr.bf16.mxu0 0
    %339 = vmatpush2.bf16.msra.mxu0 0
    %340 = vmatprep.subr.bf16.mxu0 0
    %341 = vmatpush2.bf16.msra.mxu0 0
    %342 = vmatprep.subr.bf16.mxu0 0
    %343 = vmatpush2.bf16.msra.mxu0 0
    %344 = vmatprep.subr.bf16.mxu0 0
    %345 = vmatpush2.bf16.msra.mxu0 0
    %346 = vmatprep.subr.bf16.mxu0 0
    %347 = vmatpush2.bf16.msra.mxu0 0
    %348 = vmatprep.subr.bf16.mxu0 0
    %349 = vmatpush2.bf16.msra.mxu0 0
    %350 = vmatprep.mubr.bf16.mxu0 0
    %351 = vmatmul.mubr.bf16.gmra.mxu0 %v316
    %v352 = vpop.f32.mrf.mxu0
    %v353 = vadd.f32 %v289, %v352
    %v354 = vpop.f32.mrf.mxu0
    %v355 = vadd.f32 %v291, %v354
    %v356 = vpop.f32.mrf.mxu0
    %v357 = vpop.f32.mrf.mxu0
    %358 = vdwg.mxu0
    %v359 = vld [vmem:[%s6] sm:$0x3]
    %v361 = vlaneseq
    %v362 = vshrl.u32 %v361, 7
    %v363 = vsub.s32 0, %v362
    %v364 = vrot.slane %v359, %v363
    %v365 = vlaneseq
    %v366 = vshrl.u32 %v365, 7
    %v367 = vsub.s32 1, %v366
    %v368 = vrot.slane %v359, %v367
    %v371 = vadd.f32 %v353, %v364
    %v372 = vadd.f32 %v355, %v368
    %v373 = vmin.f32 %v371, 20.0
    %v374 = vmin.f32 %v372, 20.0
    %v375 = vmul.f32 %v373, 1.442695
    %v376 = vpow.pop %v375
    %v377 = vmul.f32 %v374, 1.442695
    %v378 = vpow.pop %v377
    %v379 = vadd.f32 %v376, 2.0
    %v380 = vadd.f32 %v378, 2.0
    %v381 = vmul.f32 %v376, %v379
    %v382 = vmul.f32 %v378, %v380
    %v383 = vadd.f32 %v381, 2.0
    %v384 = vadd.f32 %v382, 2.0
    %v385 = vrcp.pop %v383
    %v386 = vrcp.pop %v384
    %v387 = vmul.f32 %v371, %v381
    %v388 = vmul.f32 %v372, %v382
    %v389 = vmul.f32 %v387, %v385
    %v390 = vmul.f32 %v388, %v386
    %v391 = vpack.c.bf16 %v389, %v389
    %v392 = vpack.c.bf16 %v390, %v390
    %v393 = vld [vmem:[#allocation11] sm:$0xff]
    %v394 = vld [vmem:[#allocation11 + $0x8] sm:$0xff]
    %v395 = vld [vmem:[#allocation11 + $0x10] sm:$0xff]
    %v396 = vld [vmem:[#allocation11 + $0x18] sm:$0xff]
    %v397 = vld [vmem:[#allocation11 + $0x20] sm:$0xff]
    %v398 = vld [vmem:[#allocation11 + $0x28] sm:$0xff]
    %v399 = vld [vmem:[#allocation11 + $0x30] sm:$0xff]
    %v400 = vld [vmem:[#allocation11 + $0x38] sm:$0xff]
    %v401 = vld [vmem:[#allocation11 + $0x40] sm:$0xff]
    %v402 = vld [vmem:[#allocation11 + $0x48] sm:$0xff]
    %v403 = vld [vmem:[#allocation11 + $0x50] sm:$0xff]
    %v404 = vld [vmem:[#allocation11 + $0x58] sm:$0xff]
    %v405 = vld [vmem:[#allocation11 + $0x60] sm:$0xff]
    %v406 = vld [vmem:[#allocation11 + $0x68] sm:$0xff]
    %v407 = vld [vmem:[#allocation11 + $0x70] sm:$0xff]
    %v408 = vld [vmem:[#allocation11 + $0x78] sm:$0xff]
    %v409 = vld [vmem:[#allocation11 + $0x80] sm:$0xff]
    %v410 = vld [vmem:[#allocation11 + $0x88] sm:$0xff]
    %v411 = vld [vmem:[#allocation11 + $0x90] sm:$0xff]
    %v412 = vld [vmem:[#allocation11 + $0x98] sm:$0xff]
    %v413 = vld [vmem:[#allocation11 + $0xa0] sm:$0xff]
    %v414 = vld [vmem:[#allocation11 + $0xa8] sm:$0xff]
    %v415 = vld [vmem:[#allocation11 + $0xb0] sm:$0xff]
    %v416 = vld [vmem:[#allocation11 + $0xb8] sm:$0xff]
    %v417 = vld [vmem:[#allocation11 + $0xc0] sm:$0xff]
    %v418 = vld [vmem:[#allocation11 + $0xc8] sm:$0xff]
    %v419 = vld [vmem:[#allocation11 + $0xd0] sm:$0xff]
    %v420 = vld [vmem:[#allocation11 + $0xd8] sm:$0xff]
    %v421 = vld [vmem:[#allocation11 + $0xe0] sm:$0xff]
    %v422 = vld [vmem:[#allocation11 + $0xe8] sm:$0xff]
    %v423 = vld [vmem:[#allocation11 + $0xf0] sm:$0xff]
    %v424 = vld [vmem:[#allocation11 + $0xf8] sm:$0xff]
    %v425 = vld [vmem:[%s8] sm:$0x3]
    %v427 = vlaneseq
    %v428 = vshrl.u32 %v427, 7
    %v429 = vsub.s32 0, %v428
    %v430 = vrot.slane %v425, %v429
    %v431 = vlaneseq
    %v432 = vshrl.u32 %v431, 7
    %v433 = vsub.s32 1, %v432
    %v434 = vrot.slane %v425, %v433
    %v469 = vunpack.c.l.b16 %v393
    %v470 = vunpack.c.h.b16 %v393
    %v471 = vunpack.c.l.b16 %v394
    %v472 = vunpack.c.h.b16 %v394
    %v473 = vunpack.c.l.b16 %v395
    %v474 = vunpack.c.h.b16 %v395
    %v475 = vunpack.c.l.b16 %v396
    %v476 = vunpack.c.h.b16 %v396
    %v477 = vunpack.c.l.b16 %v397
    %v478 = vunpack.c.h.b16 %v397
    %v479 = vunpack.c.l.b16 %v398
    %v480 = vunpack.c.h.b16 %v398
    %v481 = vunpack.c.l.b16 %v399
    %v482 = vunpack.c.h.b16 %v399
    %v483 = vunpack.c.l.b16 %v400
    %v484 = vunpack.c.h.b16 %v400
    %v485 = vunpack.c.l.b16 %v401
    %v486 = vunpack.c.h.b16 %v401
    %v487 = vunpack.c.l.b16 %v402
    %v488 = vunpack.c.h.b16 %v402
    %v489 = vunpack.c.l.b16 %v403
    %v490 = vunpack.c.h.b16 %v403
    %v491 = vunpack.c.l.b16 %v404
    %v492 = vunpack.c.h.b16 %v404
    %v493 = vunpack.c.l.b16 %v405
    %v494 = vunpack.c.h.b16 %v405
    %v495 = vunpack.c.l.b16 %v406
    %v496 = vunpack.c.h.b16 %v406
    %v497 = vunpack.c.l.b16 %v407
    %v498 = vunpack.c.h.b16 %v407
    %v499 = vunpack.c.l.b16 %v408
    %v500 = vunpack.c.h.b16 %v408
    %v501 = vunpack.c.l.b16 %v409
    %v502 = vunpack.c.h.b16 %v409
    %v503 = vunpack.c.l.b16 %v410
    %v504 = vunpack.c.h.b16 %v410
    %v505 = vunpack.c.l.b16 %v411
    %v506 = vunpack.c.h.b16 %v411
    %v507 = vunpack.c.l.b16 %v412
    %v508 = vunpack.c.h.b16 %v412
    %v509 = vunpack.c.l.b16 %v413
    %v510 = vunpack.c.h.b16 %v413
    %v511 = vunpack.c.l.b16 %v414
    %v512 = vunpack.c.h.b16 %v414
    %v513 = vunpack.c.l.b16 %v415
    %v514 = vunpack.c.h.b16 %v415
    %v515 = vunpack.c.l.b16 %v416
    %v516 = vunpack.c.h.b16 %v416
    %v517 = vunpack.c.l.b16 %v417
    %v518 = vunpack.c.h.b16 %v417
    %v519 = vunpack.c.l.b16 %v418
    %v520 = vunpack.c.h.b16 %v418
    %v521 = vunpack.c.l.b16 %v419
    %v522 = vunpack.c.h.b16 %v419
    %v523 = vunpack.c.l.b16 %v420
    %v524 = vunpack.c.h.b16 %v420
    %v525 = vunpack.c.l.b16 %v421
    %v526 = vunpack.c.h.b16 %v421
    %v527 = vunpack.c.l.b16 %v422
    %v528 = vunpack.c.h.b16 %v422
    %v529 = vunpack.c.l.b16 %v423
    %v530 = vunpack.c.h.b16 %v423
    %v531 = vunpack.c.l.b16 %v424
    %v532 = vunpack.c.h.b16 %v424
    %v533 = vpack.c.b16 %v471, %v469
    %v534 = vpack.c.b16 %v472, %v470
    %v535 = vpack.c.b16 %v475, %v473
    %v536 = vpack.c.b16 %v476, %v474
    %v537 = vpack.c.b16 %v479, %v477
    %v538 = vpack.c.b16 %v480, %v478
    %v539 = vpack.c.b16 %v483, %v481
    %v540 = vpack.c.b16 %v484, %v482
    %v541 = vpack.c.b16 %v487, %v485
    %v542 = vpack.c.b16 %v488, %v486
    %v543 = vpack.c.b16 %v491, %v489
    %v544 = vpack.c.b16 %v492, %v490
    %v545 = vpack.c.b16 %v495, %v493
    %v546 = vpack.c.b16 %v496, %v494
    %v547 = vpack.c.b16 %v499, %v497
    %v548 = vpack.c.b16 %v500, %v498
    %v549 = vpack.c.b16 %v503, %v501
    %v550 = vpack.c.b16 %v504, %v502
    %v551 = vpack.c.b16 %v507, %v505
    %v552 = vpack.c.b16 %v508, %v506
    %v553 = vpack.c.b16 %v511, %v509
    %v554 = vpack.c.b16 %v512, %v510
    %v555 = vpack.c.b16 %v515, %v513
    %v556 = vpack.c.b16 %v516, %v514
    %v557 = vpack.c.b16 %v519, %v517
    %v558 = vpack.c.b16 %v520, %v518
    %v559 = vpack.c.b16 %v523, %v521
    %v560 = vpack.c.b16 %v524, %v522
    %v561 = vpack.c.b16 %v527, %v525
    %v562 = vpack.c.b16 %v528, %v526
    %v563 = vpack.c.b16 %v531, %v529
    %v564 = vpack.c.b16 %v532, %v530
    %597 = vmatprep.subr.bf16.mxu0 %v548
    %598 = vmatpush1.bf16.msra.mxu0 %v547
    %599 = vmatprep.subr.bf16.mxu0 %v546
    %600 = vmatpush1.bf16.msra.mxu0 %v545
    %601 = vmatprep.subr.bf16.mxu0 %v544
    %602 = vmatpush1.bf16.msra.mxu0 %v543
    %603 = vmatprep.subr.bf16.mxu0 %v542
    %604 = vmatpush1.bf16.msra.mxu0 %v541
    %605 = vmatprep.subr.bf16.mxu0 %v540
    %606 = vmatpush1.bf16.msra.mxu0 %v539
    %607 = vmatprep.subr.bf16.mxu0 %v538
    %608 = vmatpush1.bf16.msra.mxu0 %v537
    %609 = vmatprep.subr.bf16.mxu0 %v536
    %610 = vmatpush1.bf16.msra.mxu0 %v535
    %611 = vmatprep.subr.bf16.mxu0 %v534
    %612 = vmatpush1.bf16.msra.mxu0 %v533
    %613 = vmatprep.subr.bf16.mxu0 %v564
    %614 = vmatpush2.bf16.msra.mxu0 %v563
    %615 = vmatprep.subr.bf16.mxu0 %v562
    %616 = vmatpush2.bf16.msra.mxu0 %v561
    %617 = vmatprep.subr.bf16.mxu0 %v560
    %618 = vmatpush2.bf16.msra.mxu0 %v559
    %619 = vmatprep.subr.bf16.mxu0 %v558
    %620 = vmatpush2.bf16.msra.mxu0 %v557
    %621 = vmatprep.subr.bf16.mxu0 %v556
    %622 = vmatpush2.bf16.msra.mxu0 %v555
    %623 = vmatprep.subr.bf16.mxu0 %v554
    %624 = vmatpush2.bf16.msra.mxu0 %v553
    %625 = vmatprep.subr.bf16.mxu0 %v552
    %626 = vmatpush2.bf16.msra.mxu0 %v551
    %627 = vmatprep.subr.bf16.mxu0 %v550
    %628 = vmatpush2.bf16.msra.mxu0 %v549
    %629 = vmatprep.mubr.bf16.mxu0 %v392
    %630 = vmatmul.mubr.bf16.gmra.mxu0 %v391
    %v631 = vpop.f32.mrf.mxu0
    %v632 = vadd.f32 %v430, %v631
    %v633 = vpop.f32.mrf.mxu0
    %v634 = vadd.f32 %v434, %v633
    %v635 = vpop.f32.mrf.mxu0
    %v636 = vpop.f32.mrf.mxu0
    %637 = vdwg.mxu0
    %v638 = vmin.f32 %v632, 20.0
    %v639 = vmin.f32 %v634, 20.0
    %v640 = vmul.f32 %v638, 1.442695
    %v641 = vpow.pop %v640
    %v642 = vmul.f32 %v639, 1.442695
    %v643 = vpow.pop %v642
    %v644 = vadd.f32 %v641, 2.0
    %v645 = vadd.f32 %v643, 2.0
    %v646 = vmul.f32 %v641, %v644
    %v647 = vmul.f32 %v643, %v645
    %v648 = vadd.f32 %v646, 2.0
    %v649 = vadd.f32 %v647, 2.0
    %v650 = vrcp.pop %v648
    %v651 = vrcp.pop %v649
    %v652 = vmul.f32 %v632, %v646
    %v653 = vmul.f32 %v634, %v647
    %v654 = vmul.f32 %v652, %v650
    %v655 = vmul.f32 %v653, %v651
    %v656 = vpack.c.bf16 %v654, %v654
    %v657 = vpack.c.bf16 %v655, %v655
    %v658 = vld [vmem:[#allocation13] sm:$0xff]
    %v659 = vld [vmem:[#allocation13 + $0x8] sm:$0xff]
    %v660 = vld [vmem:[#allocation13 + $0x10] sm:$0xff]
    %v661 = vld [vmem:[#allocation13 + $0x18] sm:$0xff]
    %v662 = vld [vmem:[#allocation13 + $0x20] sm:$0xff]
    %v663 = vld [vmem:[#allocation13 + $0x28] sm:$0xff]
    %v664 = vld [vmem:[#allocation13 + $0x30] sm:$0xff]
    %v665 = vld [vmem:[#allocation13 + $0x38] sm:$0xff]
    %v666 = vld [vmem:[#allocation13 + $0x40] sm:$0xff]
    %v667 = vld [vmem:[#allocation13 + $0x48] sm:$0xff]
    %v668 = vld [vmem:[#allocation13 + $0x50] sm:$0xff]
    %v669 = vld [vmem:[#allocation13 + $0x58] sm:$0xff]
    %v670 = vld [vmem:[#allocation13 + $0x60] sm:$0xff]
    %v671 = vld [vmem:[#allocation13 + $0x68] sm:$0xff]
    %v672 = vld [vmem:[#allocation13 + $0x70] sm:$0xff]
    %v673 = vld [vmem:[#allocation13 + $0x78] sm:$0xff]
    %v674 = vld [vmem:[#allocation13 + $0x80] sm:$0xff]
    %v675 = vld [vmem:[#allocation13 + $0x88] sm:$0xff]
    %v676 = vld [vmem:[#allocation13 + $0x90] sm:$0xff]
    %v677 = vld [vmem:[#allocation13 + $0x98] sm:$0xff]
    %v678 = vld [vmem:[#allocation13 + $0xa0] sm:$0xff]
    %v679 = vld [vmem:[#allocation13 + $0xa8] sm:$0xff]
    %v680 = vld [vmem:[#allocation13 + $0xb0] sm:$0xff]
    %v681 = vld [vmem:[#allocation13 + $0xb8] sm:$0xff]
    %v682 = vld [vmem:[#allocation13 + $0xc0] sm:$0xff]
    %v683 = vld [vmem:[#allocation13 + $0xc8] sm:$0xff]
    %v684 = vld [vmem:[#allocation13 + $0xd0] sm:$0xff]
    %v685 = vld [vmem:[#allocation13 + $0xd8] sm:$0xff]
    %v686 = vld [vmem:[#allocation13 + $0xe0] sm:$0xff]
    %v687 = vld [vmem:[#allocation13 + $0xe8] sm:$0xff]
    %v688 = vld [vmem:[#allocation13 + $0xf0] sm:$0xff]
    %v689 = vld [vmem:[#allocation13 + $0xf8] sm:$0xff]
    %v690 = vld [vmem:[%s10] sm:$0x3]
    %v692 = vlaneseq
    %v693 = vshrl.u32 %v692, 7
    %v694 = vsub.s32 0, %v693
    %v695 = vrot.slane %v690, %v694
    %v696 = vlaneseq
    %v697 = vshrl.u32 %v696, 7
    %v698 = vsub.s32 1, %v697
    %v699 = vrot.slane %v690, %v698
    %v734 = vunpack.c.l.b16 %v658
    %v735 = vunpack.c.h.b16 %v658
    %v736 = vunpack.c.l.b16 %v659
    %v737 = vunpack.c.h.b16 %v659
    %v738 = vunpack.c.l.b16 %v660
    %v739 = vunpack.c.h.b16 %v660
    %v740 = vunpack.c.l.b16 %v661
    %v741 = vunpack.c.h.b16 %v661
    %v742 = vunpack.c.l.b16 %v662
    %v743 = vunpack.c.h.b16 %v662
    %v744 = vunpack.c.l.b16 %v663
    %v745 = vunpack.c.h.b16 %v663
    %v746 = vunpack.c.l.b16 %v664
    %v747 = vunpack.c.h.b16 %v664
    %v748 = vunpack.c.l.b16 %v665
    %v749 = vunpack.c.h.b16 %v665
    %v750 = vunpack.c.l.b16 %v666
    %v751 = vunpack.c.h.b16 %v666
    %v752 = vunpack.c.l.b16 %v667
    %v753 = vunpack.c.h.b16 %v667
    %v754 = vunpack.c.l.b16 %v668
    %v755 = vunpack.c.h.b16 %v668
    %v756 = vunpack.c.l.b16 %v669
    %v757 = vunpack.c.h.b16 %v669
    %v758 = vunpack.c.l.b16 %v670
    %v759 = vunpack.c.h.b16 %v670
    %v760 = vunpack.c.l.b16 %v671
    %v761 = vunpack.c.h.b16 %v671
    %v762 = vunpack.c.l.b16 %v672
    %v763 = vunpack.c.h.b16 %v672
    %v764 = vunpack.c.l.b16 %v673
    %v765 = vunpack.c.h.b16 %v673
    %v766 = vunpack.c.l.b16 %v674
    %v767 = vunpack.c.h.b16 %v674
    %v768 = vunpack.c.l.b16 %v675
    %v769 = vunpack.c.h.b16 %v675
    %v770 = vunpack.c.l.b16 %v676
    %v771 = vunpack.c.h.b16 %v676
    %v772 = vunpack.c.l.b16 %v677
    %v773 = vunpack.c.h.b16 %v677
    %v774 = vunpack.c.l.b16 %v678
    %v775 = vunpack.c.h.b16 %v678
    %v776 = vunpack.c.l.b16 %v679
    %v777 = vunpack.c.h.b16 %v679
    %v778 = vunpack.c.l.b16 %v680
    %v779 = vunpack.c.h.b16 %v680
    %v780 = vunpack.c.l.b16 %v681
    %v781 = vunpack.c.h.b16 %v681
    %v782 = vunpack.c.l.b16 %v682
    %v783 = vunpack.c.h.b16 %v682
    %v784 = vunpack.c.l.b16 %v683
    %v785 = vunpack.c.h.b16 %v683
    %v786 = vunpack.c.l.b16 %v684
    %v787 = vunpack.c.h.b16 %v684
    %v788 = vunpack.c.l.b16 %v685
    %v789 = vunpack.c.h.b16 %v685
    %v790 = vunpack.c.l.b16 %v686
    %v791 = vunpack.c.h.b16 %v686
    %v792 = vunpack.c.l.b16 %v687
    %v793 = vunpack.c.h.b16 %v687
    %v794 = vunpack.c.l.b16 %v688
    %v795 = vunpack.c.h.b16 %v688
    %v796 = vunpack.c.l.b16 %v689
    %v797 = vunpack.c.h.b16 %v689
    %v798 = vpack.c.b16 %v736, %v734
    %v799 = vpack.c.b16 %v737, %v735
    %v800 = vpack.c.b16 %v740, %v738
    %v801 = vpack.c.b16 %v741, %v739
    %v802 = vpack.c.b16 %v744, %v742
    %v803 = vpack.c.b16 %v745, %v743
    %v804 = vpack.c.b16 %v748, %v746
    %v805 = vpack.c.b16 %v749, %v747
    %v806 = vpack.c.b16 %v752, %v750
    %v807 = vpack.c.b16 %v753, %v751
    %v808 = vpack.c.b16 %v756, %v754
    %v809 = vpack.c.b16 %v757, %v755
    %v810 = vpack.c.b16 %v760, %v758
    %v811 = vpack.c.b16 %v761, %v759
    %v812 = vpack.c.b16 %v764, %v762
    %v813 = vpack.c.b16 %v765, %v763
    %v814 = vpack.c.b16 %v768, %v766
    %v815 = vpack.c.b16 %v769, %v767
    %v816 = vpack.c.b16 %v772, %v770
    %v817 = vpack.c.b16 %v773, %v771
    %v818 = vpack.c.b16 %v776, %v774
    %v819 = vpack.c.b16 %v777, %v775
    %v820 = vpack.c.b16 %v780, %v778
    %v821 = vpack.c.b16 %v781, %v779
    %v822 = vpack.c.b16 %v784, %v782
    %v823 = vpack.c.b16 %v785, %v783
    %v824 = vpack.c.b16 %v788, %v786
    %v825 = vpack.c.b16 %v789, %v787
    %v826 = vpack.c.b16 %v792, %v790
    %v827 = vpack.c.b16 %v793, %v791
    %v828 = vpack.c.b16 %v796, %v794
    %v829 = vpack.c.b16 %v797, %v795
    %862 = vmatprep.subr.bf16.mxu0 %v813
    %863 = vmatpush1.bf16.msra.mxu0 %v812
    %864 = vmatprep.subr.bf16.mxu0 %v811
    %865 = vmatpush1.bf16.msra.mxu0 %v810
    %866 = vmatprep.subr.bf16.mxu0 %v809
    %867 = vmatpush1.bf16.msra.mxu0 %v808
    %868 = vmatprep.subr.bf16.mxu0 %v807
    %869 = vmatpush1.bf16.msra.mxu0 %v806
    %870 = vmatprep.subr.bf16.mxu0 %v805
    %871 = vmatpush1.bf16.msra.mxu0 %v804
    %872 = vmatprep.subr.bf16.mxu0 %v803
    %873 = vmatpush1.bf16.msra.mxu0 %v802
    %874 = vmatprep.subr.bf16.mxu0 %v801
    %875 = vmatpush1.bf16.msra.mxu0 %v800
    %876 = vmatprep.subr.bf16.mxu0 %v799
    %877 = vmatpush1.bf16.msra.mxu0 %v798
    %878 = vmatprep.subr.bf16.mxu0 %v829
    %879 = vmatpush2.bf16.msra.mxu0 %v828
    %880 = vmatprep.subr.bf16.mxu0 %v827
    %881 = vmatpush2.bf16.msra.mxu0 %v826
    %882 = vmatprep.subr.bf16.mxu0 %v825
    %883 = vmatpush2.bf16.msra.mxu0 %v824
    %884 = vmatprep.subr.bf16.mxu0 %v823
    %885 = vmatpush2.bf16.msra.mxu0 %v822
    %886 = vmatprep.subr.bf16.mxu0 %v821
    %887 = vmatpush2.bf16.msra.mxu0 %v820
    %888 = vmatprep.subr.bf16.mxu0 %v819
    %889 = vmatpush2.bf16.msra.mxu0 %v818
    %890 = vmatprep.subr.bf16.mxu0 %v817
    %891 = vmatpush2.bf16.msra.mxu0 %v816
    %892 = vmatprep.subr.bf16.mxu0 %v815
    %893 = vmatpush2.bf16.msra.mxu0 %v814
    %894 = vmatprep.mubr.bf16.mxu0 %v657
    %895 = vmatmul.mubr.bf16.gmra.mxu0 %v656
    %v896 = vpop.f32.mrf.mxu0
    %v897 = vadd.f32 %v695, %v896
    %v898 = vpop.f32.mrf.mxu0
    %v899 = vadd.f32 %v699, %v898
    %v900 = vpop.f32.mrf.mxu0
    %v901 = vpop.f32.mrf.mxu0
    %902 = vdwg.mxu0
    %v903 = vmin.f32 %v897, 20.0
    %v904 = vmin.f32 %v899, 20.0
    %v905 = vmul.f32 %v903, 1.442695
    %v906 = vpow.pop %v905
    %v907 = vmul.f32 %v904, 1.442695
    %v908 = vpow.pop %v907
    %v909 = vadd.f32 %v906, 2.0
    %v910 = vadd.f32 %v908, 2.0
    %v911 = vmul.f32 %v906, %v909
    %v912 = vmul.f32 %v908, %v910
    %v913 = vadd.f32 %v911, 2.0
    %v914 = vadd.f32 %v912, 2.0
    %v915 = vrcp.pop %v913
    %v916 = vrcp.pop %v914
    %v917 = vmul.f32 %v897, %v911
    %v918 = vmul.f32 %v899, %v912
    %v919 = vmul.f32 %v917, %v915
    %v920 = vmul.f32 %v918, %v916
    %v921 = vpack.c.bf16 %v919, %v919
    %v922 = vpack.c.bf16 %v920, %v920
    %v923 = vld [vmem:[#allocation14] sm:$0xf]
    %v924 = vld [vmem:[#allocation14 + $0x4] sm:$0xf]
    %v925 = vld [vmem:[#allocation14 + $0x8] sm:$0xf]
    %v926 = vld [vmem:[#allocation14 + $0xc] sm:$0xf]
    %v927 = vld [vmem:[#allocation14 + $0x10] sm:$0xf]
    %v928 = vld [vmem:[#allocation14 + $0x14] sm:$0xf]
    %v929 = vld [vmem:[#allocation14 + $0x18] sm:$0xf]
    %v930 = vld [vmem:[#allocation14 + $0x1c] sm:$0xf]
    %v931 = vld [vmem:[#allocation14 + $0x20] sm:$0xf]
    %v932 = vld [vmem:[#allocation14 + $0x24] sm:$0xf]
    %v933 = vld [vmem:[#allocation14 + $0x28] sm:$0xf]
    %v934 = vld [vmem:[#allocation14 + $0x2c] sm:$0xf]
    %v935 = vld [vmem:[#allocation14 + $0x30] sm:$0xf]
    %v936 = vld [vmem:[#allocation14 + $0x34] sm:$0xf]
    %v937 = vld [vmem:[#allocation14 + $0x38] sm:$0xf]
    %v938 = vld [vmem:[#allocation14 + $0x3c] sm:$0xf]
    %v939 = vld [vmem:[#allocation14 + $0x40] sm:$0xf]
    %v940 = vld [vmem:[#allocation14 + $0x44] sm:$0xf]
    %v941 = vld [vmem:[#allocation14 + $0x48] sm:$0xf]
    %v942 = vld [vmem:[#allocation14 + $0x4c] sm:$0xf]
    %v943 = vld [vmem:[#allocation14 + $0x50] sm:$0xf]
    %v944 = vld [vmem:[#allocation14 + $0x54] sm:$0xf]
    %v945 = vld [vmem:[#allocation14 + $0x58] sm:$0xf]
    %v946 = vld [vmem:[#allocation14 + $0x5c] sm:$0xf]
    %v947 = vld [vmem:[#allocation14 + $0x60] sm:$0xf]
    %v948 = vld [vmem:[#allocation14 + $0x64] sm:$0xf]
    %v949 = vld [vmem:[#allocation14 + $0x68] sm:$0xf]
    %v950 = vld [vmem:[#allocation14 + $0x6c] sm:$0xf]
    %v951 = vld [vmem:[#allocation14 + $0x70] sm:$0xf]
    %v952 = vld [vmem:[#allocation14 + $0x74] sm:$0xf]
    %v953 = vld [vmem:[#allocation14 + $0x78] sm:$0xf]
    %v954 = vld [vmem:[#allocation14 + $0x7c] sm:$0xf]
    %v955 = vld [vmem:[%s12] sm:$0x1]
    %v957 = vlaneseq
    %v958 = vshrl.u32 %v957, 7
    %v959 = vsub.s32 0, %v958
    %v960 = vrot.slane %v955, %v959
    %v994 = vunpack.c.l.b16 %v923
    %v995 = vunpack.c.l.b16 %v924
    %v996 = vunpack.c.l.b16 %v925
    %v997 = vunpack.c.l.b16 %v926
    %v998 = vunpack.c.l.b16 %v927
    %v999 = vunpack.c.l.b16 %v928
    %v1000 = vunpack.c.l.b16 %v929
    %v1001 = vunpack.c.l.b16 %v930
    %v1002 = vunpack.c.l.b16 %v931
    %v1003 = vunpack.c.l.b16 %v932
    %v1004 = vunpack.c.l.b16 %v933
    %v1005 = vunpack.c.l.b16 %v934
    %v1006 = vunpack.c.l.b16 %v935
    %v1007 = vunpack.c.l.b16 %v936
    %v1008 = vunpack.c.l.b16 %v937
    %v1009 = vunpack.c.l.b16 %v938
    %v1010 = vunpack.c.l.b16 %v939
    %v1011 = vunpack.c.l.b16 %v940
    %v1012 = vunpack.c.l.b16 %v941
    %v1013 = vunpack.c.l.b16 %v942
    %v1014 = vunpack.c.l.b16 %v943
    %v1015 = vunpack.c.l.b16 %v944
    %v1016 = vunpack.c.l.b16 %v945
    %v1017 = vunpack.c.l.b16 %v946
    %v1018 = vunpack.c.l.b16 %v947
    %v1019 = vunpack.c.l.b16 %v948
    %v1020 = vunpack.c.l.b16 %v949
    %v1021 = vunpack.c.l.b16 %v950
    %v1022 = vunpack.c.l.b16 %v951
    %v1023 = vunpack.c.l.b16 %v952
    %v1024 = vunpack.c.l.b16 %v953
    %v1025 = vunpack.c.l.b16 %v954
    %v1026 = vpack.c.b16 %v995, %v994
    %v1027 = vpack.c.b16 %v997, %v996
    %v1028 = vpack.c.b16 %v999, %v998
    %v1029 = vpack.c.b16 %v1001, %v1000
    %v1030 = vpack.c.b16 %v1003, %v1002
    %v1031 = vpack.c.b16 %v1005, %v1004
    %v1032 = vpack.c.b16 %v1007, %v1006
    %v1033 = vpack.c.b16 %v1009, %v1008
    %v1034 = vpack.c.b16 %v1011, %v1010
    %v1035 = vpack.c.b16 %v1013, %v1012
    %v1036 = vpack.c.b16 %v1015, %v1014
    %v1037 = vpack.c.b16 %v1017, %v1016
    %v1038 = vpack.c.b16 %v1019, %v1018
    %v1039 = vpack.c.b16 %v1021, %v1020
    %v1040 = vpack.c.b16 %v1023, %v1022
    %v1041 = vpack.c.b16 %v1025, %v1024
    %1058 = vmatprep.subr.bf16.mxu0 0
    %1059 = vmatpush1.bf16.msra.mxu0 %v1033
    %1060 = vmatprep.subr.bf16.mxu0 0
    %1061 = vmatpush1.bf16.msra.mxu0 %v1032
    %1062 = vmatprep.subr.bf16.mxu0 0
    %1063 = vmatpush1.bf16.msra.mxu0 %v1031
    %1064 = vmatprep.subr.bf16.mxu0 0
    %1065 = vmatpush1.bf16.msra.mxu0 %v1030
    %1066 = vmatprep.subr.bf16.mxu0 0
    %1067 = vmatpush1.bf16.msra.mxu0 %v1029
    %1068 = vmatprep.subr.bf16.mxu0 0
    %1069 = vmatpush1.bf16.msra.mxu0 %v1028
    %1070 = vmatprep.subr.bf16.mxu0 0
    %1071 = vmatpush1.bf16.msra.mxu0 %v1027
    %1072 = vmatprep.subr.bf16.mxu0 0
    %1073 = vmatpush1.bf16.msra.mxu0 %v1026
    %1074 = vmatprep.subr.bf16.mxu0 0
    %1075 = vmatpush2.bf16.msra.mxu0 %v1041
    %1076 = vmatprep.subr.bf16.mxu0 0
    %1077 = vmatpush2.bf16.msra.mxu0 %v1040
    %1078 = vmatprep.subr.bf16.mxu0 0
    %1079 = vmatpush2.bf16.msra.mxu0 %v1039
    %1080 = vmatprep.subr.bf16.mxu0 0
    %1081 = vmatpush2.bf16.msra.mxu0 %v1038
    %1082 = vmatprep.subr.bf16.mxu0 0
    %1083 = vmatpush2.bf16.msra.mxu0 %v1037
    %1084 = vmatprep.subr.bf16.mxu0 0
    %1085 = vmatpush2.bf16.msra.mxu0 %v1036
    %1086 = vmatprep.subr.bf16.mxu0 0
    %1087 = vmatpush2.bf16.msra.mxu0 %v1035
    %1088 = vmatprep.subr.bf16.mxu0 0
    %1089 = vmatpush2.bf16.msra.mxu0 %v1034
    %1090 = vmatprep.mubr.bf16.mxu0 %v922
    %1091 = vmatmul.mubr.bf16.gmra.mxu0 %v921
    %v1092 = vpop.f32.mrf.mxu0
    %v1093 = vadd.f32 %v960, %v1092
    %v1094 = vpop.f32.mrf.mxu0
    %v1095 = vpop.f32.mrf.mxu0
    %v1096 = vpop.f32.mrf.mxu0
    %1097 = vdwg.mxu0
    %v1098 = vtanh.pop %v1093
    %v1099 = vmul.f32 %v1098, 2.0
    %v1100 = vpack.c.bf16 %v1099, %v1099
    %1101 = vst [vmem:[#allocation16] sm:$0xf] %v1100
    // Predicated region
    $region86: #{tpu_custom_call.1} parent=1 // pred_check
      _
    $region87: #{tpu_custom_call.1} parent=1 // pred_check_branch
      %1103 = sbr.rel (0) target = $region89
    $region88: #{tpu_custom_call.1} parent=1 // pred_region
      %s1105 = ssub.s32 64, 64
      %1106 = vsyncadd [#allocation4], %s1105
      %s1108 = sshll.u32 [#allocation16], 4
      %s1109 = int_to_ptr.vmem [resolvable:$true] %s1108
      %1111 = dma.vmem_to_hbm [thread:$0]  %s1109, 64, %s13, [#allocation4]
    $region89: #{tpu_custom_call.1} parent=1 // pred_fallthru
      _
    // Predicated region
    $region90: #{tpu_custom_call.1} parent=1 // pred_check
      _
    $region91: #{tpu_custom_call.1} parent=1 // pred_check_branch
      %1113 = sbr.rel (0) target = $region93
    $region92: #{tpu_custom_call.1} parent=1 // pred_region
      %1114 = dma.done [#allocation4], 64
    $region93: #{tpu_custom_call.1} parent=1 // pred_fallthru
      _
    %1115 = vsyncpa [#allocation3], 1
    %1116 = vsyncpa [#allocation6], 1
    %1117 = vsyncpa [#allocation9], 1
    %1118 = vsyncpa [#allocation12], 1
    %1119 = vsyncpa [#allocation15], 1
    %1120 = vsyncpa [#allocation4], 1

</llo_original>
